<compile_context>
chip_gen: v6e
topology: v6e:2x2x1
jax: 0.10.0
libtpu: 0.0.40
codegen_flags: <defaults>
</compile_context>

<pallas_src>
import functools
import math

import jax
import jax.numpy as jnp
from jax import lax
from jax.experimental import pallas as pl
from jax.experimental.pallas import tpu as pltpu


def _cdiv(a, b):
    return -(-a // b)


def _round_up(a, b):
    return _cdiv(a, b) * b


def _conv1x1_stride_kernel(x_ref, w_ref, o_ref, *, w_valid, wo, col_stride,
                           trows, use_concat):
    # x_ref: (Cin, trows, WIN)  WIN = s*W (row-folded layout) or W (fallback)
    # w_ref: (Cout, Cin)        resident across the grid
    # o_ref: (Cout, trows*Wo)   lane-dense flattened output tile
    cin = x_ref.shape[0]
    win = x_ref.shape[2]

    # Keep only the first W lanes of each folded wide row == input row r*s.
    if win != w_valid:
        x = x_ref[:, :, :w_valid]            # (Cin, trows, W) contiguous lane slice
    else:
        x = x_ref[...]

    # Stack (Cin, trows) rows along sublanes for plain 2-D matmuls.
    xr = x.reshape(cin * trows, w_valid)      # (Cin*trows, W)

    if col_stride > 1:
        # W-stride subsample as a one-hot lane-compaction matmul (MXU slack).
        wi = lax.broadcasted_iota(jnp.int32, (w_valid, wo), 0)
        oi = lax.broadcasted_iota(jnp.int32, (w_valid, wo), 1)
        sel = (wi == oi * col_stride).astype(x.dtype)
        xc = jnp.dot(xr, sel, preferred_element_type=jnp.float32)   # (Cin*trows, Wo)
    else:
        xc = xr

    # Flatten (Cin*trows, Wo) -> (Cin, trows*Wo) so the channel matmul emits a
    # lane-dense (Cout, TP) tile directly.  Small row counts use a static
    # slice+concat (cheapest/safest); large ones use a generic reshape.
    if use_concat:
        xc3 = xc.reshape(cin, trows, wo)
        xflat = jnp.concatenate([xc3[:, r, :] for r in range(trows)], axis=-1)
    else:
        xflat = xc.reshape(cin, trows * wo)

    out = jnp.dot(w_ref[...], xflat, preferred_element_type=jnp.float32)
    o_ref[...] = out.astype(o_ref.dtype)


def downsample_c(x, weight, stride):
    """Pallas TPU equivalent of DownsampleC.forward (1x1 conv, stride s, no bias).

    x:      (N, Cin, H, W)     NCHW
    weight: (Cout, Cin, 1, 1)  OIHW
    returns (N, Cout, Ho, Wo) with Ho = (H-1)//s + 1, Wo = (W-1)//s + 1.
    """
    N, Cin, H, W = x.shape
    Cout = weight.shape[0]
    s = int(stride)
    Ho = (H - 1) // s + 1
    Wo = (W - 1) // s + 1
    P = Ho * Wo
    w2 = weight.reshape(Cout, Cin)

    # Fuse the H-stride into the BlockSpec: a free contiguous reshape folds each
    # group of `s` input rows into one wide row; the kernel drops the extras.
    if H % s == 0:
        xin = x.reshape(N, Cin, Ho, s * W)
    else:
        # TODO(synk): H % stride != 0 — fall back to a rows-only strided slice
        # (much cheaper than the old full 2-D slice; W-stride stays fused).
        xin = x[:, :, ::s, :]
    win = xin.shape[3]

    # ---- Tile selection ------------------------------------------------------
    # Fixed lane-dense pixel target per step (512-4096 sweet spot).  Small
    # images: whole image per step.  When row tiling is needed, trows must be a
    # multiple of 8 (sublane) and trows*Wo a multiple of 128 (lane).
    TP_TARGET = 2048
    lane_mult = 128 // math.gcd(Wo, 128)
    m = math.lcm(8, lane_mult)
    if Ho * Wo <= TP_TARGET:
        trows = Ho
    else:
        trows = max(m, (max(1, TP_TARGET // Wo) // m) * m)
        if trows >= Ho:
            trows = Ho
    # Best effort: keep >= 2 grid steps so both v7x TensorCores get work.
    if N * _cdiv(Ho, trows) < 2 and Ho > 1:
        half = ((Ho // 2) // m) * m
        if 0 < half < Ho:
            trows = half
    n_rtiles = _cdiv(Ho, trows)
    tp = trows * Wo

    # ---- VMEM accounting (sublane padding + double-buffered pipeline) -------
    itemsize = jnp.dtype(x.dtype).itemsize
    sub = max(8, 32 // itemsize)              # 8 for f32, 16 for bf16
    x_tile = Cin * _round_up(trows, sub) * _round_up(win, 128) * itemsize
    o_tile = _round_up(Cout, sub) * _round_up(tp, 128) * itemsize
    w_tile = _round_up(Cout, sub) * _round_up(Cin, 128) * itemsize
    need = 2 * (x_tile + o_tile + w_tile)     # 2 pipeline buffers per operand
    vmem_limit = int(min(48 * 1024 * 1024, max(16 * 1024 * 1024, 2 * need)))

    kernel = functools.partial(
        _conv1x1_stride_kernel,
        w_valid=W, wo=Wo, col_stride=s, trows=trows,
        use_concat=(trows <= 32),
    )

    out3 = pl.pallas_call(
        kernel,
        out_shape=jax.ShapeDtypeStruct((N, Cout, P), x.dtype),
        grid=(N, n_rtiles),
        in_specs=[
            # Row-tile of the (row-folded) image; batch dim squeezed away.
            pl.BlockSpec((None, Cin, trows, win), lambda n, t: (n, 0, t, 0)),
            # Full weight, resident across all grid steps.
            pl.BlockSpec((Cout, Cin), lambda n, t: (0, 0)),
        ],
        out_specs=pl.BlockSpec((None, Cout, tp), lambda n, t: (n, 0, t)),
        compiler_params=pltpu.CompilerParams(
            dimension_semantics=("parallel", "parallel"),
            vmem_limit_bytes=vmem_limit,
        ),
    )(xin, w2)

    # (N, Cout, Ho*Wo) -> (N, Cout, Ho, Wo): contiguous reshape, no transpose.
    return out3.reshape(N, Cout, Ho, Wo)


if __name__ == "__main__":
    # Module config consistent with DownsampleC's assert (stride != 1 or nIn != nOut).
    nIn, nOut, stride = 4, 8, 2
    N, H, W = 2, 16, 16

    key = jax.random.PRNGKey(0)
    kx, kw = jax.random.split(key)

    x = jax.random.normal(kx, (N, nIn, H, W), dtype=jnp.float32)
    # Deterministic synthetic init of the (nOut, nIn, 1, 1) conv weight
    # (kaiming-uniform-like scale; not a checkpoint load).
    bound = 1.0 / (nIn ** 0.5)
    weight = jax.random.uniform(
        kw, (nOut, nIn, 1, 1), dtype=jnp.float32, minval=-bound, maxval=bound
    )

    y = jax.block_until_ready(downsample_c(x, weight, stride))

    # Cross-check against XLA's conv (pure-JAX reference of the same op).
    y_ref = lax.conv_general_dilated(
        x, weight, window_strides=(stride, stride), padding="VALID",
        dimension_numbers=("NCHW", "OIHW", "NCHW"),
    )
    assert y.shape == (N, nOut, H // stride, W // stride), y.shape
    assert jnp.allclose(y, y_ref, atol=1e-5, rtol=1e-5)

    print("KERNEL_OK")
</pallas_src>

<mosaic_0001>
module attributes {stable_mosaic.version = 11 : i64} {
  func.func @_conv1x1_stride_kernel(%arg0: i32, %arg1: i32, %arg2: memref<1x4x8x32xf32, #tpu.memory_space<vmem>>, %arg3: memref<8x4xf32, #tpu.memory_space<vmem>>, %arg4: memref<1x8x64xf32, #tpu.memory_space<vmem>>) attributes {dimension_semantics = [#tpu.dimension_semantics<parallel>, #tpu.dimension_semantics<parallel>], iteration_bounds = array<i64: 2, 1>, scalar_prefetch = 0 : i64, scratch_operands = 0 : i64, tpu.core_type = #tpu.core_type<tc>, window_params = [{transform_indices = @transform_0, window_bounds = array<i64: 1, 4, 8, 32>}, {pipeline_mode = #tpu.pipeline_mode<synchronous>, transform_indices = @transform_1, window_bounds = array<i64: 8, 4>}, {transform_indices = @transform_2, window_bounds = array<i64: 1, 8, 64>}]} {
    %c0 = arith.constant 0 : index
    %c0_0 = arith.constant 0 : index
    %c0_1 = arith.constant 0 : index
    %c0_2 = arith.constant 0 : index
    %0 = vector.load %arg2[%c0, %c0_0, %c0_1, %c0_2] : memref<1x4x8x32xf32, #tpu.memory_space<vmem>>, vector<1x4x8x16xf32>
    %1 = vector.shape_cast %0 : vector<1x4x8x16xf32> to vector<4x8x16xf32>
    %2 = vector.shape_cast %1 : vector<4x8x16xf32> to vector<32x16xf32>
    %3 = tpu.iota {dimensions = array<i32: 0>} : vector<16x8xi32>
    %4 = tpu.iota {dimensions = array<i32: 1>} : vector<16x8xi32>
    %c2_i32 = arith.constant 2 : i32
    %5 = vector.broadcast %c2_i32 : i32 to vector<16x8xi32>
    %6 = arith.muli %4, %5 : vector<16x8xi32>
    %7 = arith.cmpi eq, %3, %6 : vector<16x8xi32>
    %8 = arith.extui %7 : vector<16x8xi1> to vector<16x8xi32>
    %9 = arith.sitofp %8 : vector<16x8xi32> to vector<16x8xf32>
    %cst = arith.constant dense<0.000000e+00> : vector<32x8xf32>
    %10 = tpu.matmul %2, %9, %cst {dimension_numbers = #tpu.dot_dimension_numbers<[1], [0], [0], [1], [0, 0, 1, 1], [], []>} : vector<32x16xf32>, vector<16x8xf32>, vector<32x8xf32> -> vector<32x8xf32>
    %11 = vector.shape_cast %10 : vector<32x8xf32> to vector<4x8x8xf32>
    %12 = vector.extract_strided_slice %11 {offsets = [0, 0, 0], sizes = [4, 1, 8], strides = [1, 1, 1]} : vector<4x8x8xf32> to vector<4x1x8xf32>
    %13 = vector.shape_cast %12 : vector<4x1x8xf32> to vector<4x8xf32>
    %14 = vector.extract_strided_slice %11 {offsets = [0, 1, 0], sizes = [4, 1, 8], strides = [1, 1, 1]} : vector<4x8x8xf32> to vector<4x1x8xf32>
    %15 = vector.shape_cast %14 : vector<4x1x8xf32> to vector<4x8xf32>
    %16 = vector.extract_strided_slice %11 {offsets = [0, 2, 0], sizes = [4, 1, 8], strides = [1, 1, 1]} : vector<4x8x8xf32> to vector<4x1x8xf32>
    %17 = vector.shape_cast %16 : vector<4x1x8xf32> to vector<4x8xf32>
    %18 = vector.extract_strided_slice %11 {offsets = [0, 3, 0], sizes = [4, 1, 8], strides = [1, 1, 1]} : vector<4x8x8xf32> to vector<4x1x8xf32>
    %19 = vector.shape_cast %18 : vector<4x1x8xf32> to vector<4x8xf32>
    %20 = vector.extract_strided_slice %11 {offsets = [0, 4, 0], sizes = [4, 1, 8], strides = [1, 1, 1]} : vector<4x8x8xf32> to vector<4x1x8xf32>
    %21 = vector.shape_cast %20 : vector<4x1x8xf32> to vector<4x8xf32>
    %22 = vector.extract_strided_slice %11 {offsets = [0, 5, 0], sizes = [4, 1, 8], strides = [1, 1, 1]} : vector<4x8x8xf32> to vector<4x1x8xf32>
    %23 = vector.shape_cast %22 : vector<4x1x8xf32> to vector<4x8xf32>
    %24 = vector.extract_strided_slice %11 {offsets = [0, 6, 0], sizes = [4, 1, 8], strides = [1, 1, 1]} : vector<4x8x8xf32> to vector<4x1x8xf32>
    %25 = vector.shape_cast %24 : vector<4x1x8xf32> to vector<4x8xf32>
    %26 = vector.extract_strided_slice %11 {offsets = [0, 7, 0], sizes = [4, 1, 8], strides = [1, 1, 1]} : vector<4x8x8xf32> to vector<4x1x8xf32>
    %27 = vector.shape_cast %26 : vector<4x1x8xf32> to vector<4x8xf32>
    %28 = tpu.concatenate %13, %15, %17, %19, %21, %23, %25, %27 in 1 : vector<4x8xf32>, vector<4x8xf32>, vector<4x8xf32>, vector<4x8xf32>, vector<4x8xf32>, vector<4x8xf32>, vector<4x8xf32>, vector<4x8xf32> -> vector<4x64xf32>
    %c0_3 = arith.constant 0 : index
    %c0_4 = arith.constant 0 : index
    %29 = vector.load %arg3[%c0_3, %c0_4] : memref<8x4xf32, #tpu.memory_space<vmem>>, vector<8x4xf32>
    %cst_5 = arith.constant dense<0.000000e+00> : vector<8x64xf32>
    %30 = tpu.matmul %29, %28, %cst_5 {dimension_numbers = #tpu.dot_dimension_numbers<[1], [0], [0], [1], [0, 0, 1, 1], [], []>} : vector<8x4xf32>, vector<4x64xf32>, vector<8x64xf32> -> vector<8x64xf32>
    %c0_6 = arith.constant 0 : index
    %c0_7 = arith.constant 0 : index
    %c0_8 = arith.constant 0 : index
    %31 = vector.load %arg4[%c0_6, %c0_7, %c0_8] : memref<1x8x64xf32, #tpu.memory_space<vmem>>, vector<1x8x64xf32>
    %32 = vector.shape_cast %31 : vector<1x8x64xf32> to vector<8x64xf32>
    %33 = vector.shape_cast %30 : vector<8x64xf32> to vector<1x8x64xf32>
    tpu.vector_store %arg4[%c0_6, %c0_7, %c0_8], %33 {strides = array<i32>} : memref<1x8x64xf32, #tpu.memory_space<vmem>>, vector<1x8x64xf32>,
    return
  }
  func.func @transform_0(%arg0: i32, %arg1: i32) -> (i32, i32, i32, i32) {
    %c0_i32 = arith.constant 0 : i32
    %c0_i32_0 = arith.constant 0 : i32
    %c0_i32_1 = arith.constant 0 : i32
    return %arg0, %c0_i32, %arg1, %c0_i32_0 : i32, i32, i32, i32
  }
  func.func @transform_1(%arg0: i32, %arg1: i32) -> (i32, i32) {
    %c0_i32 = arith.constant 0 : i32
    %c0_i32_0 = arith.constant 0 : i32
    %c0_i32_1 = arith.constant 0 : i32
    return %c0_i32, %c0_i32_0 : i32, i32
  }
  func.func @transform_2(%arg0: i32, %arg1: i32) -> (i32, i32, i32) {
    %c0_i32 = arith.constant 0 : i32
    %c0_i32_0 = arith.constant 0 : i32
    return %arg0, %c0_i32, %arg1 : i32, i32, i32
  }
}

</mosaic_0001>

<llo_original>
// kernel: tpu_custom_call.1
$region0: #{tpu_custom_call.1}
  #allocation0 [shape = 'u32[]', space=smem, size = 0x4, offset = 0x4, fixed_abs, tag = 'smem constant byte address 0x4 - core index']
  #allocation1 [shape = 'u32[144,128]{1,0:T(1,128)}', space=vmem, size = 0x12000, scoped, tag = 'internal scratch']
  %s0 = inlined_call_operand.hbm [shape: f32[2,4,8,32], index: 0, kind: input, shape index: {}]
  %s1 = inlined_call_operand.vmem [shape: f32[8,4], index: 1, kind: input, shape index: {}]
  %s2 = inlined_call_operand.hbm [shape: f32[2,8,64], index: 2, kind: output, shape index: {}]
  %s3 = sld [smem:[#allocation0]]
  $region45: #{tpu_custom_call.1} parent=0
    _
  %s5 = ssub.s32 1, %s3
  %s6 = scalar_select 0, %s5, %s3
  $region1: #{tpu_custom_call.1} parent=0
    #allocation2 [shape = 'u8[32768]{0}', space=vmem, size = 0x8000, scoped, tag = 'input window, operand 0']
    #allocation3 [shape = 's32[2]{0}', space=sflag, size = 0x8, scoped, tag = 'scoped memory for tpu_custom_call.1']
    #allocation4 [shape = 's32[2]{0}', space=sflag, size = 0x8, scoped, tag = 'scoped memory for tpu_custom_call.1']
    #allocation5 [shape = 'u8[8192]{0}', space=vmem, size = 0x2000, scoped, tag = 'output window, operand 0']
    %7 = vsyncpa [#allocation3], 0
    %s8 = scalar_lea.sflag [#allocation3], 1
    %9 = vsyncpa %s8, 0
    %10 = vsyncpa [#allocation4], 0
    %s11 = scalar_lea.sflag [#allocation4], 1
    %12 = vsyncpa %s11, 0
    loop: start=0, step=1, limit=4
    $region2: #{tpu_custom_call.1} parent=1 // loop_pre_header
      _
    $region3: #{tpu_custom_call.1} parent=1 // loop_header
      %s14 = sphi 0, %s18
      %p15 = scmp.ge.s32.totalorder %s14, 4
      %s21 = sphi 0, %s33
      %s22 = sphi 0, %s29
      %s23 = sphi 0, %s21
      %s24 = sphi 0, %s22
      %s25 = sphi 0, %s23
      %s26 = sphi 0, %s24
      %s38 = sphi 0, %s40
      %s41 = sphi 0, %s38
      %s42 = sphi 0, %s41
      %s58 = sphi 0, %s42
      %s62 = sphi 0, %s62
      %s64 = sphi 0, %s62
      %s65 = sphi 0, %s64
      %s79 = sphi 0, %s65
      %s87 = sphi 0, %s89
      %s90 = sphi 0, %s87
      %s91 = sphi 0, %s90
      %s107 = sphi 0, %s91
    $region4: #{tpu_custom_call.1} parent=1 // loop_header_branch
      %17 = sbr.rel (%p15) target = $region8
    $region5: #{tpu_custom_call.1} parent=1 // loop_body
      %s19 = ssub.s32 %s14, 1
      %s20 = ssub.s32 %s14, 2
      %s27 = sadd.s32 1, %s22
      %p28 = scmp.ge.s32.totalorder %s27, 1
      %s29 = scalar_select %p28, 0, %s27
      %s30 = sadd.s32 1, %s21
      %s31 = scalar_select %p28, %s30, %s21
      %p32 = scmp.ge.s32.totalorder %s31, 2
      %s33 = scalar_select %p32, 0, %s31
      %s34 = ssub.s32 %s21, %s33
      %s35 = ssub.s32 %s22, %s29
      %s36 = sor.u32 %s34, %s35
      %p37 = scmp.eq.s32.totalorder %s36, 0
      %s39 = sadd.s32 %s38, 1
      %s40 = scalar_select %p37, %s38, %s39
      %p43 = pneg %p37
      %p44 = scmp.eq.s32.totalorder %s14, 1
      %p45 = por %p43, %p44
      %p46 = scmp.ne.s32.totalorder %s38, %s41
      %p47 = scmp.eq.s32.totalorder %s14, 0
      %p48 = por %p46, %p47
      %p49 = scmp.ne.s32.totalorder %s38, %s41
      %p50 = scmp.eq.s32.totalorder %s19, 1
      %p51 = por %p49, %p50
      %p52 = scmp.ne.s32.totalorder %s41, %s42
      %p53 = scmp.eq.s32.totalorder %s19, 0
      %p54 = por %p52, %p53
      %p55 = scmp.ne.s32.totalorder %s41, %s42
      %p56 = scmp.eq.s32.totalorder %s20, 1
      %p57 = por %p55, %p56
      %p59 = scmp.ne.s32.totalorder %s42, %s58
      %p60 = scmp.eq.s32.totalorder %s20, 0
      %p61 = por %p59, %p60
      %s63 = sadd.s32 %s62, 1
      %p66 = scmp.eq.s32.totalorder %s14, 1
      %p67 = scmp.ne.s32.totalorder %s62, %s64
      %p68 = scmp.eq.s32.totalorder %s14, 0
      %p69 = por %p67, %p68
      %p70 = scmp.ne.s32.totalorder %s62, %s64
      %p71 = scmp.eq.s32.totalorder %s19, 1
      %p72 = por %p70, %p71
      %p73 = scmp.ne.s32.totalorder %s64, %s65
      %p74 = scmp.eq.s32.totalorder %s19, 0
      %p75 = por %p73, %p74
      %p76 = scmp.ne.s32.totalorder %s64, %s65
      %p77 = scmp.eq.s32.totalorder %s20, 1
      %p78 = por %p76, %p77
      %p80 = scmp.ne.s32.totalorder %s65, %s79
      %p81 = scmp.eq.s32.totalorder %s20, 0
      %p82 = por %p80, %p81
      %s83 = ssub.s32 %s21, %s33
      %s84 = ssub.s32 %s22, %s29
      %s85 = sor.u32 %s83, %s84
      %p86 = scmp.eq.s32.totalorder %s85, 0
      %s88 = sadd.s32 %s87, 1
      %s89 = scalar_select %p86, %s87, %s88
      %p92 = pneg %p86
      %p93 = scmp.eq.s32.totalorder %s14, 1
      %p94 = por %p92, %p93
      %p95 = scmp.ne.s32.totalorder %s87, %s90
      %p96 = scmp.eq.s32.totalorder %s14, 0
      %p97 = por %p95, %p96
      %p98 = scmp.ne.s32.totalorder %s87, %s90
      %p99 = scmp.eq.s32.totalorder %s19, 1
      %p100 = por %p98, %p99
      %p101 = scmp.ne.s32.totalorder %s90, %s91
      %p102 = scmp.eq.s32.totalorder %s19, 0
      %p103 = por %p101, %p102
      %p104 = scmp.ne.s32.totalorder %s90, %s91
      %p105 = scmp.eq.s32.totalorder %s20, 1
      %p106 = por %p104, %p105
      %p108 = scmp.ne.s32.totalorder %s91, %s107
      %p109 = scmp.eq.s32.totalorder %s20, 0
      %p110 = por %p108, %p109
      %p111 = scmp.le.s32.totalorder 1, %s14
      %p112 = scmp.lt.s32.totalorder %s14, 3
      %p113 = pnand %p111, %p112
      %p114 = pneg %p113
      // Predicated region
      $region9: #{tpu_custom_call.1} parent=5 // pred_check
        _
      $region10: #{tpu_custom_call.1} parent=5 // pred_check_branch
        %116 = sbr.rel (%p113) target = $region12
      $region11: #{tpu_custom_call.1} parent=5 // pred_region
        %s117 = ssub.s32 %s14, 1
        // Predicated region
        $region13: #{tpu_custom_call.1} parent=11 // pred_check
          %p118 = pneg %p75
        $region14: #{tpu_custom_call.1} parent=11 // pred_check_branch
          %120 = sbr.rel (%p118) target = $region16
        $region15: #{tpu_custom_call.1} parent=11 // pred_region
          _
        $region16: #{tpu_custom_call.1} parent=11 // pred_fallthru
          _
      $region12: #{tpu_custom_call.1} parent=5 // pred_fallthru
        _
      %p121 = scmp.lt.s32.totalorder %s14, 2
      // Predicated region
      $region17: #{tpu_custom_call.1} parent=5 // pred_check
        %p122 = pneg %p121
      $region18: #{tpu_custom_call.1} parent=5 // pred_check_branch
        %124 = sbr.rel (%p122) target = $region20
      $region19: #{tpu_custom_call.1} parent=5 // pred_region
        // Predicated region
        $region21: #{tpu_custom_call.1} parent=19 // pred_check
          %p125 = pneg %p48
        $region22: #{tpu_custom_call.1} parent=19 // pred_check_branch
          %127 = sbr.rel (%p125) target = $region24
        $region23: #{tpu_custom_call.1} parent=19 // pred_region
          %s128 = sand.u32 %s38, 1
          %s129 = scalar_lea.sflag [#allocation3], %s128
          %s130 = sand.u32 %s38, 1
          %s131 = smul.addr %s130, 32
          %s132 = scalar_lea.vmem [#allocation2], %s131
          %s134 = ssub.s32 512, 512
          %135 = vsyncadd %s129, %s134
          %s136 = smul.addr %s21, 4
          %s137 = sadd.s32 %s22, %s136
          %s138 = smul.addr %s137, 128
          %s139 = scalar_lea.hbm %s0, %s138
          %s140 = sshll.u32 %s132, 4
          %s141 = int_to_ptr.vmem [resolvable:$true] %s140
          %146 = dma.hbm_to_vmem [thread:$0]  %s139, 512, %s141, %s129, 128, 128, 8
        $region24: #{tpu_custom_call.1} parent=19 // pred_fallthru
          _
      $region20: #{tpu_custom_call.1} parent=5 // pred_fallthru
        _
      %p147 = scmp.le.s32.totalorder 1, %s14
      %p148 = scmp.lt.s32.totalorder %s14, 3
      %p149 = pnand %p147, %p148
      %p150 = pneg %p149
      // Predicated region
      $region25: #{tpu_custom_call.1} parent=5 // pred_check
        _
      $region26: #{tpu_custom_call.1} parent=5 // pred_check_branch
        %152 = sbr.rel (%p149) target = $region28
      $region27: #{tpu_custom_call.1} parent=5 // pred_region
        %s153 = ssub.s32 %s14, 1
        %s154 = sand.u32 %s41, 1
        %s155 = scalar_lea.sflag [#allocation3], %s154
        %s156 = sand.u32 %s41, 1
        %s157 = smul.addr %s156, 32
        %s158 = scalar_lea.vmem [#allocation2], %s157
        // Predicated region
        $region29: #{tpu_custom_call.1} parent=27 // pred_check
          %p159 = pneg %p54
        $region30: #{tpu_custom_call.1} parent=27 // pred_check_branch
          %161 = sbr.rel (%p159) target = $region32
        $region31: #{tpu_custom_call.1} parent=27 // pred_region
          %162 = dma.done %s155, 512
        $region32: #{tpu_custom_call.1} parent=27 // pred_fallthru
          _
        %s163 = sand.u32 %s41, 1
        %s164 = scalar_lea.sflag [#allocation3], %s163
        %s165 = sand.u32 %s41, 1
        %s166 = smul.addr %s165, 32
        %s167 = scalar_lea.vmem [#allocation2], %s166
        %p168 = pneg %p54
        %p169 = pneg %p51
        %p170 = pneg %p75
        %p171 = pneg %p72
        %p172 = pneg %p103
        %p173 = pneg %p100
        %s174 = sand.u32 %s90, 1
        %s175 = scalar_lea.sflag [#allocation4], %s174
        %s176 = sand.u32 %s90, 1
        %s177 = smul.addr %s176, 8
        %s178 = scalar_lea.vmem [#allocation5], %s177
        %v179 = vld [vmem:[%s158] sm:$0xff]
        %v180 = vld [vmem:[%s158 + $0x8] sm:$0xff]
        %v181 = vld [vmem:[%s158 + $0x10] sm:$0xff]
        %v182 = vld [vmem:[%s158 + $0x18] sm:$0xff]
        %v183 = vlaneseq
        %v184 = vshrl.u32 %v183, 7
        %v185 = vadd.s32 %v184, 8
        %v186 = vlaneseq
        %v187 = vand.u32 %v186, 127
        %v188 = vmul.u32 %v187, 2
        %vm189 = vcmp.eq.s32.totalorder %v184, %v188
        %vm190 = vcmp.eq.s32.totalorder %v185, %v188
        %v191 = vsel %vm189, 1, 0
        %v192 = vsel %vm190, 1, 0
        %v193 = vcvt.s32.f32 %v191
        %v194 = vcvt.s32.f32 %v192
        %vm195 = vcmask 130048
        %v197 = vsel %vm195, %v179, 0
        %v200 = vsel %vm195, %v180, 0
        %v203 = vsel %vm195, %v181, 0
        %v206 = vsel %vm195, %v182, 0
        %208 = vmatprep.subr.mxu0 0.0
        %209 = vmatpush1.msra.mxu0 0.0
        %210 = vmatprep.subr.mxu0 0.0
        %211 = vmatpush1.msra.mxu0 0.0
        %212 = vmatprep.subr.mxu0 0.0
        %213 = vmatpush1.msra.mxu0 0.0
        %214 = vmatprep.subr.mxu0 0.0
        %215 = vmatpush1.msra.mxu0 0.0
        %216 = vmatprep.subr.mxu0 0.0
        %217 = vmatpush1.msra.mxu0 0.0
        %218 = vmatprep.subr.mxu0 0.0
        %219 = vmatpush1.msra.mxu0 0.0
        %220 = vmatprep.subr.mxu0 0.0
        %221 = vmatpush1.msra.mxu0 0.0
        %222 = vmatprep.subr.mxu0 0.0
        %223 = vmatpush1.msra.mxu0 0.0
        %224 = vmatprep.subr.mxu0 0.0
        %225 = vmatpush1.msra.mxu0 0.0
        %226 = vmatprep.subr.mxu0 0.0
        %227 = vmatpush1.msra.mxu0 0.0
        %228 = vmatprep.subr.mxu0 0.0
        %229 = vmatpush1.msra.mxu0 0.0
        %230 = vmatprep.subr.mxu0 0.0
        %231 = vmatpush1.msra.mxu0 0.0
        %232 = vmatprep.subr.mxu0 0.0
        %233 = vmatpush1.msra.mxu0 0.0
        %234 = vmatprep.subr.mxu0 0.0
        %235 = vmatpush1.msra.mxu0 0.0
        %236 = vmatprep.subr.mxu0 0.0
        %237 = vmatpush1.msra.mxu0 %v194
        %238 = vmatprep.subr.mxu0 0.0
        %239 = vmatpush1.msra.mxu0 %v193
        %240 = vmatprep.subr.mxu0 0.0
        %241 = vmatpush2.msra.mxu0 0.0
        %242 = vmatprep.subr.mxu0 0.0
        %243 = vmatpush2.msra.mxu0 0.0
        %244 = vmatprep.subr.mxu0 0.0
        %245 = vmatpush2.msra.mxu0 0.0
        %246 = vmatprep.subr.mxu0 0.0
        %247 = vmatpush2.msra.mxu0 0.0
        %248 = vmatprep.subr.mxu0 0.0
        %249 = vmatpush2.msra.mxu0 0.0
        %250 = vmatprep.subr.mxu0 0.0
        %251 = vmatpush2.msra.mxu0 0.0
        %252 = vmatprep.subr.mxu0 0.0
        %253 = vmatpush2.msra.mxu0 0.0
        %254 = vmatprep.subr.mxu0 0.0
        %255 = vmatpush2.msra.mxu0 0.0
        %256 = vmatprep.subr.mxu0 0.0
        %257 = vmatpush2.msra.mxu0 0.0
        %258 = vmatprep.subr.mxu0 0.0
        %259 = vmatpush2.msra.mxu0 0.0
        %260 = vmatprep.subr.mxu0 0.0
        %261 = vmatpush2.msra.mxu0 0.0
        %262 = vmatprep.subr.mxu0 0.0
        %263 = vmatpush2.msra.mxu0 0.0
        %264 = vmatprep.subr.mxu0 0.0
        %265 = vmatpush2.msra.mxu0 0.0
        %266 = vmatprep.subr.mxu0 0.0
        %267 = vmatpush2.msra.mxu0 0.0
        %268 = vmatprep.subr.mxu0 0.0
        %269 = vmatpush2.msra.mxu0 0.0
        %270 = vmatprep.subr.mxu0 0.0
        %271 = vmatpush2.msra.mxu0 0.0
        %272 = vmatprep.mubr.f32.mxu0 0.0
        %273 = vmatmul.mubr.f32.gmra.mxu0 %v197
        %v274 = vpop.f32.mrf.mxu0
        %v275 = vadd.f32 0.0, %v274
        %v276 = vpop.f32.mrf.mxu0
        %277 = vmatprep.mubr.f32.mxu0 0.0
        %278 = vmatmul.mubr.f32.gmra.mxu0 %v200
        %v279 = vpop.f32.mrf.mxu0
        %v280 = vadd.f32 0.0, %v279
        %v281 = vpop.f32.mrf.mxu0
        %282 = vmatprep.mubr.f32.mxu0 0.0
        %283 = vmatmul.mubr.f32.gmra.mxu0 %v203
        %v284 = vpop.f32.mrf.mxu0
        %v285 = vadd.f32 0.0, %v284
        %v286 = vpop.f32.mrf.mxu0
        %287 = vmatprep.mubr.f32.mxu0 0.0
        %288 = vmatmul.mubr.f32.gmra.mxu0 %v206
        %v289 = vpop.f32.mrf.mxu0
        %v290 = vadd.f32 0.0, %v289
        %v291 = vpop.f32.mrf.mxu0
        %292 = vdwg.mxu0
        %v297 = vrot.slane %v280, 7
        %vm298 = vcmask 1041409
        %v299 = vsel %vm298, %v297, %v275
        %v300 = vrot.slane %v285, 6
        %vm301 = vcmask 1042434
        %v302 = vsel %vm301, %v300, %v299
        %v303 = vrot.slane %v290, 5
        %vm304 = vcmask 1043459
        %v305 = vsel %vm304, %v303, %v302
        %v307 = vrot.slane %v275, 1
        %v308 = vsel %vm298, %v280, %v307
        %v309 = vrot.slane %v285, 7
        %v310 = vsel %vm301, %v309, %v308
        %v311 = vrot.slane %v290, 6
        %v312 = vsel %vm304, %v311, %v310
        %313 = vrot.lane.b32.xlu0 %v312, 8
        %v314 = vpop.permute.xlu0 %313
        %v316 = vrot.slane %v275, 2
        %v317 = vrot.slane %v280, 1
        %v318 = vsel %vm298, %v317, %v316
        %v319 = vsel %vm301, %v285, %v318
        %v320 = vrot.slane %v290, 7
        %v321 = vsel %vm304, %v320, %v319
        %322 = vrot.lane.b32.xlu0 %v321, 16
        %v323 = vpop.permute.xlu0 %322
        %v325 = vrot.slane %v275, 3
        %v326 = vrot.slane %v280, 2
        %v327 = vsel %vm298, %v326, %v325
        %v328 = vrot.slane %v285, 1
        %v329 = vsel %vm301, %v328, %v327
        %v330 = vsel %vm304, %v290, %v329
        %331 = vrot.lane.b32.xlu0 %v330, 24
        %v332 = vpop.permute.xlu0 %331
        %v334 = vrot.slane %v275, 4
        %v335 = vrot.slane %v280, 3
        %v336 = vsel %vm298, %v335, %v334
        %v337 = vrot.slane %v285, 2
        %v338 = vsel %vm301, %v337, %v336
        %v339 = vrot.slane %v290, 1
        %v340 = vsel %vm304, %v339, %v338
        %341 = vrot.lane.b32.xlu0 %v340, 32
        %v342 = vpop.permute.xlu0 %341
        %v344 = vrot.slane %v275, 5
        %v345 = vrot.slane %v280, 4
        %v346 = vsel %vm298, %v345, %v344
        %v347 = vrot.slane %v285, 3
        %v348 = vsel %vm301, %v347, %v346
        %v349 = vrot.slane %v290, 2
        %v350 = vsel %vm304, %v349, %v348
        %351 = vrot.lane.b32.xlu0 %v350, 40
        %v352 = vpop.permute.xlu0 %351
        %v354 = vrot.slane %v275, 6
        %v355 = vrot.slane %v280, 5
        %v356 = vsel %vm298, %v355, %v354
        %v357 = vrot.slane %v285, 4
        %v358 = vsel %vm301, %v357, %v356
        %v359 = vrot.slane %v290, 3
        %v360 = vsel %vm304, %v359, %v358
        %361 = vrot.lane.b32.xlu0 %v360, 48
        %v362 = vpop.permute.xlu0 %361
        %v364 = vrot.slane %v275, 7
        %v365 = vrot.slane %v280, 6
        %v366 = vsel %vm298, %v365, %v364
        %v367 = vrot.slane %v285, 5
        %v368 = vsel %vm301, %v367, %v366
        %v369 = vrot.slane %v290, 4
        %v370 = vsel %vm304, %v369, %v368
        %371 = vrot.lane.b32.xlu0 %v370, 56
        %v372 = vpop.permute.xlu0 %371
        %vm374 = vcmask 64512
        %v375 = vsel %vm374, %v305, %v314
        %v376 = vsel %vm195, %v375, %v323
        %vm377 = vcmask 195584
        %v378 = vsel %vm377, %v376, %v332
        %vm379 = vcmask 261120
        %v380 = vsel %vm379, %v378, %v342
        %vm381 = vcmask 326656
        %v382 = vsel %vm381, %v380, %v352
        %vm383 = vcmask 392192
        %v384 = vsel %vm383, %v382, %v362
        %vm385 = vcmask 457728
        %v386 = vsel %vm385, %v384, %v372
        %v387 = vld [vmem:[%s1] sm:$0xff]
        %vm388 = vcmask 31744
        %v390 = vsel %vm388, %v387, 0
        %vm392 = vcmask 1043456
        %v394 = vsel %vm392, %v386, 0
        %396 = vmatprep.subr.mxu0 0.0
        %397 = vmatpush1.msra.mxu0 0.0
        %398 = vmatprep.subr.mxu0 0.0
        %399 = vmatpush1.msra.mxu0 0.0
        %400 = vmatprep.subr.mxu0 0.0
        %401 = vmatpush1.msra.mxu0 0.0
        %402 = vmatprep.subr.mxu0 0.0
        %403 = vmatpush1.msra.mxu0 0.0
        %404 = vmatprep.subr.mxu0 0.0
        %405 = vmatpush1.msra.mxu0 0.0
        %406 = vmatprep.subr.mxu0 0.0
        %407 = vmatpush1.msra.mxu0 0.0
        %408 = vmatprep.subr.mxu0 0.0
        %409 = vmatpush1.msra.mxu0 0.0
        %410 = vmatprep.subr.mxu0 0.0
        %411 = vmatpush1.msra.mxu0 0.0
        %412 = vmatprep.subr.mxu0 0.0
        %413 = vmatpush1.msra.mxu0 0.0
        %414 = vmatprep.subr.mxu0 0.0
        %415 = vmatpush1.msra.mxu0 0.0
        %416 = vmatprep.subr.mxu0 0.0
        %417 = vmatpush1.msra.mxu0 0.0
        %418 = vmatprep.subr.mxu0 0.0
        %419 = vmatpush1.msra.mxu0 0.0
        %420 = vmatprep.subr.mxu0 0.0
        %421 = vmatpush1.msra.mxu0 0.0
        %422 = vmatprep.subr.mxu0 0.0
        %423 = vmatpush1.msra.mxu0 0.0
        %424 = vmatprep.subr.mxu0 0.0
        %425 = vmatpush1.msra.mxu0 0.0
        %426 = vmatprep.subr.mxu0 0.0
        %427 = vmatpush1.msra.mxu0 %v394
        %428 = vmatprep.subr.mxu0 0.0
        %429 = vmatpush2.msra.mxu0 0.0
        %430 = vmatprep.subr.mxu0 0.0
        %431 = vmatpush2.msra.mxu0 0.0
        %432 = vmatprep.subr.mxu0 0.0
        %433 = vmatpush2.msra.mxu0 0.0
        %434 = vmatprep.subr.mxu0 0.0
        %435 = vmatpush2.msra.mxu0 0.0
        %436 = vmatprep.subr.mxu0 0.0
        %437 = vmatpush2.msra.mxu0 0.0
        %438 = vmatprep.subr.mxu0 0.0
        %439 = vmatpush2.msra.mxu0 0.0
        %440 = vmatprep.subr.mxu0 0.0
        %441 = vmatpush2.msra.mxu0 0.0
        %442 = vmatprep.subr.mxu0 0.0
        %443 = vmatpush2.msra.mxu0 0.0
        %444 = vmatprep.subr.mxu0 0.0
        %445 = vmatpush2.msra.mxu0 0.0
        %446 = vmatprep.subr.mxu0 0.0
        %447 = vmatpush2.msra.mxu0 0.0
        %448 = vmatprep.subr.mxu0 0.0
        %449 = vmatpush2.msra.mxu0 0.0
        %450 = vmatprep.subr.mxu0 0.0
        %451 = vmatpush2.msra.mxu0 0.0
        %452 = vmatprep.subr.mxu0 0.0
        %453 = vmatpush2.msra.mxu0 0.0
        %454 = vmatprep.subr.mxu0 0.0
        %455 = vmatpush2.msra.mxu0 0.0
        %456 = vmatprep.subr.mxu0 0.0
        %457 = vmatpush2.msra.mxu0 0.0
        %458 = vmatprep.subr.mxu0 0.0
        %459 = vmatpush2.msra.mxu0 0.0
        %460 = vmatprep.mubr.f32.mxu0 0.0
        %461 = vmatmul.mubr.f32.gmra.mxu0 %v390
        %v462 = vpop.f32.mrf.mxu0
        %v463 = vadd.f32 0.0, %v462
        %v464 = vpop.f32.mrf.mxu0
        %465 = vdwg.mxu0
        %vm466 = vcmask 523264
        %467 = vst.msk [vmem:[%s178] sm:$0xff] %vm466, %v463
        %s468 = sand.u32 %s90, 1
        %s469 = scalar_lea.sflag [#allocation4], %s468
        %s470 = sand.u32 %s90, 1
        %s471 = smul.addr %s470, 8
        %s472 = scalar_lea.vmem [#allocation5], %s471
        // Predicated region
        $region33: #{tpu_custom_call.1} parent=27 // pred_check
          %p473 = pneg %p100
        $region34: #{tpu_custom_call.1} parent=27 // pred_check_branch
          %475 = sbr.rel (%p473) target = $region36
        $region35: #{tpu_custom_call.1} parent=27 // pred_region
          %s477 = ssub.s32 128, 128
          %478 = vsyncadd %s469, %s477
          %s479 = sadd.s32 %s24, %s23
          %s480 = smul.addr %s479, 128
          %s481 = scalar_lea.hbm %s2, %s480
          %s483 = sshll.u32 %s472, 4
          %s484 = int_to_ptr.vmem [resolvable:$true] %s483
          %486 = dma.vmem_to_hbm [thread:$0]  %s484, 128, %s481, %s469
        $region36: #{tpu_custom_call.1} parent=27 // pred_fallthru
          _
      $region28: #{tpu_custom_call.1} parent=5 // pred_fallthru
        _
      %p487 = scmp.le.s32.totalorder 2, %s14
      // Predicated region
      $region37: #{tpu_custom_call.1} parent=5 // pred_check
        %p488 = pneg %p487
      $region38: #{tpu_custom_call.1} parent=5 // pred_check_branch
        %490 = sbr.rel (%p488) target = $region40
      $region39: #{tpu_custom_call.1} parent=5 // pred_region
        %s491 = ssub.s32 %s14, 2
        // Predicated region
        $region41: #{tpu_custom_call.1} parent=39 // pred_check
          %p492 = pneg %p106
        $region42: #{tpu_custom_call.1} parent=39 // pred_check_branch
          %494 = sbr.rel (%p492) target = $region44
        $region43: #{tpu_custom_call.1} parent=39 // pred_region
          %s495 = sand.u32 %s91, 1
          %s496 = scalar_lea.sflag [#allocation4], %s495
          %s497 = sand.u32 %s91, 1
          %s498 = smul.addr %s497, 8
          %s499 = scalar_lea.vmem [#allocation5], %s498
          %500 = dma.done %s496, 128
        $region44: #{tpu_custom_call.1} parent=39 // pred_fallthru
          _
      $region40: #{tpu_custom_call.1} parent=5 // pred_fallthru
        _
    $region6: #{tpu_custom_call.1} parent=1 // loop_footer
      %s18 = sadd.s32 1, %s14
    $region7: #{tpu_custom_call.1} parent=1 // loop_footer_branch
      %13 = sbr.rel target = $region3
    $region8: #{tpu_custom_call.1} parent=1 // loop_exit
      _
    %501 = vsyncpa [#allocation3], 1
    %s502 = scalar_lea.sflag [#allocation3], 1
    %503 = vsyncpa %s502, 1
    %504 = vsyncpa [#allocation4], 1
    %s505 = scalar_lea.sflag [#allocation4], 1
    %506 = vsyncpa %s505, 1

</llo_original>
